<compile_context>
chip_gen: v5e
topology: v5e:2x2
jax: 0.10.0
libtpu: 0.0.40
codegen_flags: <defaults>
</compile_context>

<pallas_src>
import functools

import jax
import jax.numpy as jnp
import numpy as np
from jax.experimental import pallas as pl
from jax.experimental.pallas import tpu as pltpu

KH = KW = 3
STRIDE = 2
PADDING = 1
CIN = 16
COUT = 32
NPHASE = 4                 # output parity classes (ee, eo, oe, oo)
NPHASE_PAD = 8             # sublane-pad the phase dim
K_POLY = 4 * CIN           # 64 : (2x2 neighbor) x channel contraction dim
TM_MAX = 2048              # output pixels (lanes) per grid step
NEIGHBORS = ((0, 0), (0, 1), (1, 0), (1, 1))


def _poly_kernel(p_ref, w_ref, b_ref, o_ref):
    # p_ref: (64, TM)  polyphase patches, lane-dense along output pixels
    # w_ref: (8, 64)   per-phase fused conv(x)linear weights (rows 0..3 real)
    # b_ref: (8, 1)    fused scalar bias (broadcast along lanes)
    # o_ref: (8, TM)   4 real phase rows + 4 pad rows, lane-dense
    acc = jnp.dot(w_ref[...], p_ref[...], preferred_element_type=jnp.float32)
    o_ref[...] = jnp.clip(acc + b_ref[...], 0.0, 6.0)


@functools.partial(jax.jit, static_argnames=("use_bf16",))
def model_forward(x_nchw, w_t, b_conv, w_lin, b_lin, use_bf16=False):
    """x_nchw: (1, 16, H, W) float32.  Returns NHWC output (1, Hout, Wout, 1)."""
    n, cin, h, w = x_nchw.shape
    assert n == 1 and cin == CIN
    hout = (h - 1) * STRIDE - 2 * PADDING + KH   # = 2h - 1
    wout = (w - 1) * STRIDE - 2 * PADDING + KW   # = 2w - 1

    # ---- polyphase patch build (XLA glue, fused under jit; channel-first is
    #      the native NCHW layout so no big transpose) ----
    m4 = h * w
    tm = min(TM_MAX, pl.cdiv(m4, 128) * 128)
    n_tiles = pl.cdiv(m4, tm)
    m_pad = n_tiles * tm

    x_c = x_nchw[0].astype(jnp.float32)                      # (16, H, W)
    x_cp = jnp.pad(x_c, ((0, 0), (0, 1), (0, 1)))            # (16, H+1, W+1)
    views = [x_cp[:, dh:dh + h, dw:dw + w].reshape(CIN, m4)
             for dh, dw in NEIGHBORS]
    patches = jnp.concatenate(views, axis=0)                  # (64, M4)
    patches = jnp.pad(patches, ((0, 0), (0, m_pad - m4)))

    # ---- fused weights: wf[kh,kw,c] = sum_co Wconv[c,co,kh,kw] * Wlin[0,co] ----
    # Direct transposed-conv indexing (oh = 2*ih + kh - 1): no spatial flip.
    wf = jnp.einsum("cokl,o->klc", w_t.astype(jnp.float32),
                    w_lin[0].astype(jnp.float32))             # (3, 3, 16)
    b_fused = (jnp.dot(b_conv.astype(jnp.float32), w_lin[0].astype(jnp.float32))
               + b_lin.astype(jnp.float32)[0])

    z16 = jnp.zeros((CIN,), jnp.float32)
    rows = [
        jnp.concatenate([wf[1, 1], z16, z16, z16]),                  # (even, even)
        jnp.concatenate([wf[1, 2], wf[1, 0], z16, z16]),             # (even, odd)
        jnp.concatenate([wf[2, 1], z16, wf[0, 1], z16]),             # (odd,  even)
        jnp.concatenate([wf[2, 2], wf[2, 0], wf[0, 2], wf[0, 0]]),   # (odd,  odd)
    ]
    w4 = jnp.stack(rows + [jnp.zeros((K_POLY,), jnp.float32)] * (NPHASE_PAD - NPHASE))
    b_col = b_fused * jnp.ones((NPHASE_PAD, 1), jnp.float32)

    if use_bf16:   # bf16-native MXU on v5e/v6e/v7x; accumulation stays f32
        patches = patches.astype(jnp.bfloat16)
        w4 = w4.astype(jnp.bfloat16)

    itemsize = 2 if use_bf16 else 4
    cost = pl.CostEstimate(
        flops=2 * NPHASE_PAD * K_POLY * m_pad,
        transcendentals=0,
        bytes_accessed=((K_POLY * m_pad + NPHASE_PAD * K_POLY) * itemsize
                        + NPHASE_PAD * 4 + NPHASE_PAD * m_pad * 4))

    out = pl.pallas_call(
        _poly_kernel,
        out_shape=jax.ShapeDtypeStruct((NPHASE_PAD, m_pad), jnp.float32),
        grid_spec=pltpu.PrefetchScalarGridSpec(
            num_scalar_prefetch=0,
            grid=(n_tiles,),
            in_specs=[
                pl.BlockSpec((K_POLY, tm), lambda i: (0, i)),
                pl.BlockSpec((NPHASE_PAD, K_POLY), lambda i: (0, 0)),
                pl.BlockSpec((NPHASE_PAD, 1), lambda i: (0, 0)),
            ],
            out_specs=pl.BlockSpec((NPHASE_PAD, tm), lambda i: (0, i)),
        ),
        compiler_params=pltpu.CompilerParams(
            dimension_semantics=("parallel",),
        ),
        cost_estimate=cost,
    )(patches, w4, b_col)

    # ---- sub-pixel interleave (tiny XLA glue): out[2i+r, 2j+s] = P[2r+s][i, j]
    planes = out[:NPHASE, :m4].reshape(NPHASE, h, w)
    quad = jnp.stack([jnp.stack([planes[0], planes[1]], axis=-1),
                      jnp.stack([planes[2], planes[3]], axis=-1)], axis=1)  # (h,2,w,2)
    full = quad.reshape(2 * h, 2 * w)[:hout, :wout]
    return full.reshape(1, hout, wout, 1)


def ref_forward(x, w_t, b_conv, w_lin, b_lin):
    """Independent numpy reference: ConvTranspose2d + channels-last Linear + ReLU6."""
    x = np.asarray(x, np.float32)
    w_t = np.asarray(w_t, np.float32)
    n, cin, h, w = x.shape
    hout = (h - 1) * STRIDE - 2 * PADDING + KH
    wout = (w - 1) * STRIDE - 2 * PADDING + KW
    out = np.zeros((n, COUT, hout, wout), np.float32)
    for ih in range(h):
        for iw in range(w):
            for kh in range(KH):
                for kw in range(KW):
                    oh = ih * STRIDE + kh - PADDING
                    ow = iw * STRIDE + kw - PADDING
                    if 0 <= oh < hout and 0 <= ow < wout:
                        out[:, :, oh, ow] += x[:, :, ih, iw] @ w_t[:, :, kh, kw]
    out += np.asarray(b_conv, np.float32)[None, :, None, None]
    v = np.transpose(out, (0, 2, 3, 1))  # NHWC
    v = v @ np.asarray(w_lin, np.float32).T + np.asarray(b_lin, np.float32)
    return np.clip(v, 0.0, 6.0)


if __name__ == "__main__":
    key = jax.random.PRNGKey(0)
    k_x, k_wc, k_bc, k_wl, k_bl = jax.random.split(key, 5)

    H = W = 16
    x = jax.random.normal(k_x, (1, CIN, H, W), jnp.float32)           # NCHW input
    w_t = jax.random.normal(k_wc, (CIN, COUT, KH, KW), jnp.float32) * 0.1
    b_conv = jax.random.normal(k_bc, (COUT,), jnp.float32) * 0.1
    w_lin = jax.random.normal(k_wl, (1, COUT), jnp.float32) * 0.1     # Linear(32,1).weight
    b_lin = jax.random.normal(k_bl, (1,), jnp.float32) * 0.1

    ref = ref_forward(np.array(x), np.array(w_t), np.array(b_conv),
                      np.array(w_lin), np.array(b_lin))

    # f32 path
    out = jax.block_until_ready(
        model_forward(x, w_t, b_conv, w_lin, b_lin, use_bf16=False))
    np.testing.assert_allclose(np.array(out), ref, rtol=1e-3, atol=1e-3)

    # bf16-operand path (beneficial on v5e/v6e/v7x), relaxed tolerance
    out_bf16 = jax.block_until_ready(
        model_forward(x, w_t, b_conv, w_lin, b_lin, use_bf16=True))
    np.testing.assert_allclose(np.array(out_bf16), ref, rtol=2e-2, atol=2e-2)

    print("KERNEL_OK")
</pallas_src>

<mosaic_0001>
module attributes {stable_mosaic.version = 11 : i64} {
  func.func @_poly_kernel(%arg0: i32, %arg1: memref<64x256xf32, #tpu.memory_space<vmem>>, %arg2: memref<8x64xf32, #tpu.memory_space<vmem>>, %arg3: memref<8x1xf32, #tpu.memory_space<vmem>>, %arg4: memref<8x256xf32, #tpu.memory_space<vmem>>) attributes {dimension_semantics = [#tpu.dimension_semantics<parallel>], iteration_bounds = array<i64: 1>, scalar_prefetch = 0 : i64, scratch_operands = 0 : i64, tpu.core_type = #tpu.core_type<tc>, window_params = [{transform_indices = @transform_0, window_bounds = array<i64: 64, 256>}, {pipeline_mode = #tpu.pipeline_mode<synchronous>, transform_indices = @transform_1, window_bounds = array<i64: 8, 64>}, {pipeline_mode = #tpu.pipeline_mode<synchronous>, transform_indices = @transform_2, window_bounds = array<i64: 8, 1>}, {transform_indices = @transform_3, window_bounds = array<i64: 8, 256>}]} {
    %c0 = arith.constant 0 : index
    %c0_0 = arith.constant 0 : index
    %0 = vector.load %arg2[%c0, %c0_0] : memref<8x64xf32, #tpu.memory_space<vmem>>, vector<8x64xf32>
    %c0_1 = arith.constant 0 : index
    %c0_2 = arith.constant 0 : index
    %1 = vector.load %arg1[%c0_1, %c0_2] : memref<64x256xf32, #tpu.memory_space<vmem>>, vector<64x256xf32>
    %cst = arith.constant dense<0.000000e+00> : vector<8x256xf32>
    %2 = tpu.matmul %0, %1, %cst {dimension_numbers = #tpu.dot_dimension_numbers<[1], [0], [0], [1], [0, 0, 1, 1], [], []>} : vector<8x64xf32>, vector<64x256xf32>, vector<8x256xf32> -> vector<8x256xf32>
    %c0_3 = arith.constant 0 : index
    %c0_4 = arith.constant 0 : index
    %3 = vector.load %arg3[%c0_3, %c0_4] : memref<8x1xf32, #tpu.memory_space<vmem>>, vector<8x1xf32>
    %4 = vector.broadcast %3 : vector<8x1xf32> to vector<8x256xf32>
    %5 = arith.addf %2, %4 : vector<8x256xf32>
    %cst_5 = arith.constant 0.000000e+00 : f32
    %cst_6 = arith.constant 6.000000e+00 : f32
    %6 = vector.broadcast %cst_5 : f32 to vector<8x256xf32>
    %7 = arith.maximumf %6, %5 : vector<8x256xf32>
    %8 = vector.broadcast %cst_6 : f32 to vector<8x256xf32>
    %9 = arith.minimumf %8, %7 : vector<8x256xf32>
    %c0_7 = arith.constant 0 : index
    %c0_8 = arith.constant 0 : index
    %10 = vector.load %arg4[%c0_7, %c0_8] : memref<8x256xf32, #tpu.memory_space<vmem>>, vector<8x256xf32>
    tpu.vector_store %arg4[%c0_7, %c0_8], %9 {strides = array<i32>} : memref<8x256xf32, #tpu.memory_space<vmem>>, vector<8x256xf32>,
    return
  }
  func.func @transform_0(%arg0: i32) -> (i32, i32) {
    %c0_i32 = arith.constant 0 : i32
    %c0_i32_0 = arith.constant 0 : i32
    return %c0_i32, %arg0 : i32, i32
  }
  func.func @transform_1(%arg0: i32) -> (i32, i32) {
    %c0_i32 = arith.constant 0 : i32
    %c0_i32_0 = arith.constant 0 : i32
    %c0_i32_1 = arith.constant 0 : i32
    return %c0_i32, %c0_i32_0 : i32, i32
  }
  func.func @transform_2(%arg0: i32) -> (i32, i32) {
    %c0_i32 = arith.constant 0 : i32
    %c0_i32_0 = arith.constant 0 : i32
    %c0_i32_1 = arith.constant 0 : i32
    return %c0_i32, %c0_i32_0 : i32, i32
  }
  func.func @transform_3(%arg0: i32) -> (i32, i32) {
    %c0_i32 = arith.constant 0 : i32
    %c0_i32_0 = arith.constant 0 : i32
    return %c0_i32, %arg0 : i32, i32
  }
}

</mosaic_0001>

<llo_original>
// kernel: mul.1
$region0: #{mul.1}
  #allocation0 [shape = 's32[1]{0}', space=sflag, size = 0x4, scoped, tag = 'scoped memory for mul.1']
  %s0 = inlined_call_operand.<no memory space> [shape: f32[], index: 0, kind: input, shape index: {}]
  %s1 = inlined_call_operand.vmem [shape: f32[8,1], index: 1, kind: output, shape index: {}]
  %v2 = vstv %s0
  %3 = vst [vmem:[%s1] sm:$0xff] %v2

// kernel: squeeze.30
$region0: #{squeeze.30}
  %s0 = inlined_call_operand.vmem [shape: f32[256], index: 0, kind: input, shape index: {}]
  %s1 = inlined_call_operand.vmem [shape: f32[16,16,1], index: 1, kind: output, shape index: {}]
  $region1: #{squeeze.30} parent=0
    #allocation0 [shape = 'u8[4096]{0}', space=vmem, size = 0x1000, scoped, tag = 'scoped mem for input reshape']
    %s3 = ssub.s32 4, 1
    %v4 = vld [vmem:[%s0] sm:%s3]
    %5 = vst [vmem:[#allocation0] sm:%s3] %v4
    %v6 = vld [vmem:[#allocation0] sm:$0x3]
    %vm7 = vcmask 130048
    %8 = vst.msk [vmem:[%s1] ss:$8 sm:$0x3] %vm7, %v6
    %v9 = vld [vmem:[#allocation0] sm:$0x3]
    %10 = vrot.lane.b32.xlu0 %v9, 112
    %v11 = vpop.permute.xlu0 %10
    %vm12 = vcmask 130048
    %s13 = scalar_lea.vmem %s1, 1
    %14 = vst.msk [vmem:[%s13] ss:$8 sm:$0x3] %vm12, %v11
    %v15 = vld [vmem:[#allocation0] sm:$0x3]
    %16 = vrot.lane.b32.xlu0 %v15, 96
    %v17 = vpop.permute.xlu0 %16
    %vm18 = vcmask 130048
    %s19 = scalar_lea.vmem %s1, 2
    %20 = vst.msk [vmem:[%s19] ss:$8 sm:$0x3] %vm18, %v17
    %v21 = vld [vmem:[#allocation0] sm:$0x3]
    %22 = vrot.lane.b32.xlu0 %v21, 80
    %v23 = vpop.permute.xlu0 %22
    %vm24 = vcmask 130048
    %s25 = scalar_lea.vmem %s1, 3
    %26 = vst.msk [vmem:[%s25] ss:$8 sm:$0x3] %vm24, %v23
    %v27 = vld [vmem:[#allocation0] sm:$0x3]
    %28 = vrot.lane.b32.xlu0 %v27, 64
    %v29 = vpop.permute.xlu0 %28
    %vm30 = vcmask 130048
    %s31 = scalar_lea.vmem %s1, 4
    %32 = vst.msk [vmem:[%s31] ss:$8 sm:$0x3] %vm30, %v29
    %v33 = vld [vmem:[#allocation0] sm:$0x3]
    %34 = vrot.lane.b32.xlu0 %v33, 48
    %v35 = vpop.permute.xlu0 %34
    %vm36 = vcmask 130048
    %s37 = scalar_lea.vmem %s1, 5
    %38 = vst.msk [vmem:[%s37] ss:$8 sm:$0x3] %vm36, %v35
    %v39 = vld [vmem:[#allocation0] sm:$0x3]
    %40 = vrot.lane.b32.xlu0 %v39, 32
    %v41 = vpop.permute.xlu0 %40
    %vm42 = vcmask 130048
    %s43 = scalar_lea.vmem %s1, 6
    %44 = vst.msk [vmem:[%s43] ss:$8 sm:$0x3] %vm42, %v41
    %v45 = vld [vmem:[#allocation0] sm:$0x3]
    %46 = vrot.lane.b32.xlu0 %v45, 16
    %v47 = vpop.permute.xlu0 %46
    %vm48 = vcmask 130048
    %s49 = scalar_lea.vmem %s1, 7
    %50 = vst.msk [vmem:[%s49] ss:$8 sm:$0x3] %vm48, %v47

// kernel: model_forward.1
$region0: #{model_forward.1}
  #allocation0 [shape = 'u32[]', space=smem, size = 0x4, offset = 0x4, fixed_abs, tag = 'smem constant byte address 0x4 - core index']
  #allocation1 [shape = 'u32[72,128]{1,0:T(1,128)}', space=vmem, size = 0x9000, scoped, tag = 'internal scratch']
  %s0 = inlined_call_operand.vmem [shape: f32[64,256], index: 0, kind: input, shape index: {}]
  %s1 = inlined_call_operand.vmem [shape: f32[8,64], index: 1, kind: input, shape index: {}]
  %s2 = inlined_call_operand.vmem [shape: f32[8,1], index: 2, kind: input, shape index: {}]
  %s3 = inlined_call_operand.vmem [shape: f32[8,256], index: 3, kind: output, shape index: {}]
  %s4 = sld [smem:[#allocation0]]
  $region22: #{model_forward.1} parent=0
    _
  %s6 = ssub.s32 1, %s4
  %s7 = scalar_select 0, %s6, %s4
  // Predicated region
  $region2: #{model_forward.1} parent=0 // pred_check
    _
  $region3: #{model_forward.1} parent=0 // pred_check_branch
    %9 = sbr.rel (0) target = $region5
  $region4: #{model_forward.1} parent=0 // pred_region
    _
  $region5: #{model_forward.1} parent=0 // pred_fallthru
    _
  // Predicated region
  $region6: #{model_forward.1} parent=0 // pred_check
    _
  $region7: #{model_forward.1} parent=0 // pred_check_branch
    %11 = sbr.rel (0) target = $region9
  $region8: #{model_forward.1} parent=0 // pred_region
    _
  $region9: #{model_forward.1} parent=0 // pred_fallthru
    _
  // Predicated region
  $region10: #{model_forward.1} parent=0 // pred_check
    _
  $region11: #{model_forward.1} parent=0 // pred_check_branch
    %13 = sbr.rel (0) target = $region13
  $region12: #{model_forward.1} parent=0 // pred_region
    _
  $region13: #{model_forward.1} parent=0 // pred_fallthru
    _
  %v14 = vld [vmem:[%s1] sm:$0xff]
  %v15 = vld [vmem:[%s0] sm:$0xff]
  %v16 = vld [vmem:[%s0 + $0x8] sm:$0xff]
  %v17 = vld [vmem:[%s0 + $0x10] sm:$0xff]
  %v18 = vld [vmem:[%s0 + $0x18] sm:$0xff]
  %v19 = vld [vmem:[%s0 + $0x20] sm:$0xff]
  %v20 = vld [vmem:[%s0 + $0x28] sm:$0xff]
  %v21 = vld [vmem:[%s0 + $0x30] sm:$0xff]
  %v22 = vld [vmem:[%s0 + $0x38] sm:$0xff]
  %v23 = vld [vmem:[%s0 + $0x40] sm:$0xff]
  %v24 = vld [vmem:[%s0 + $0x48] sm:$0xff]
  %v25 = vld [vmem:[%s0 + $0x50] sm:$0xff]
  %v26 = vld [vmem:[%s0 + $0x58] sm:$0xff]
  %v27 = vld [vmem:[%s0 + $0x60] sm:$0xff]
  %v28 = vld [vmem:[%s0 + $0x68] sm:$0xff]
  %v29 = vld [vmem:[%s0 + $0x70] sm:$0xff]
  %v30 = vld [vmem:[%s0 + $0x78] sm:$0xff]
  %v31 = vld [vmem:[%s2] sm:$0xff]
  %33 = vset.pattern.permute.xlu0 0
  %34 = vperm.xlu0 %33, %v31
  %v35 = vpop.permute.xlu0 %34
  %vm37 = vcmask 523264
  %v39 = vsel %vm37, %v14, 0
  %41 = vmatpush.msra.mxu0 0.0
  %42 = vmatpush.msra.mxu0 0.0
  %43 = vmatpush.msra.mxu0 0.0
  %44 = vmatpush.msra.mxu0 0.0
  %45 = vmatpush.msra.mxu0 0.0
  %46 = vmatpush.msra.mxu0 0.0
  %47 = vmatpush.msra.mxu0 0.0
  %48 = vmatpush.msra.mxu0 0.0
  %49 = vmatpush.msra.mxu0 %v29
  %50 = vmatpush.msra.mxu0 %v27
  %51 = vmatpush.msra.mxu0 %v25
  %52 = vmatpush.msra.mxu0 %v23
  %53 = vmatpush.msra.mxu0 %v21
  %54 = vmatpush.msra.mxu0 %v19
  %55 = vmatpush.msra.mxu0 %v17
  %56 = vmatpush.msra.mxu0 %v15
  %57 = vmatmul.f32.gmra.mxu0 %v39
  %v58 = vpop.f32.mrf.mxu0
  %v59 = vadd.f32 %v35, %v58
  %60 = vdwg.mxu0
  %61 = vmatpush.msra.mxu0 0.0
  %62 = vmatpush.msra.mxu0 0.0
  %63 = vmatpush.msra.mxu0 0.0
  %64 = vmatpush.msra.mxu0 0.0
  %65 = vmatpush.msra.mxu0 0.0
  %66 = vmatpush.msra.mxu0 0.0
  %67 = vmatpush.msra.mxu0 0.0
  %68 = vmatpush.msra.mxu0 0.0
  %69 = vmatpush.msra.mxu0 %v30
  %70 = vmatpush.msra.mxu0 %v28
  %71 = vmatpush.msra.mxu0 %v26
  %72 = vmatpush.msra.mxu0 %v24
  %73 = vmatpush.msra.mxu0 %v22
  %74 = vmatpush.msra.mxu0 %v20
  %75 = vmatpush.msra.mxu0 %v18
  %76 = vmatpush.msra.mxu0 %v16
  %77 = vmatmul.f32.gmra.mxu0 %v39
  %v78 = vpop.f32.mrf.mxu0
  %v79 = vadd.f32 %v35, %v78
  %80 = vdwg.mxu0
  %v81 = vmax.f32 %v59, 0.0
  %v82 = vmax.f32 %v79, 0.0
  %v83 = vmin.f32 %v81, 6.0
  %v84 = vmin.f32 %v82, 6.0
  %85 = vst [vmem:[%s3] sm:$0xff] %v83
  %86 = vst [vmem:[%s3 + $0x8] sm:$0xff] %v84
  // Predicated region
  $region14: #{model_forward.1} parent=0 // pred_check
    _
  $region15: #{model_forward.1} parent=0 // pred_check_branch
    %88 = sbr.rel (0) target = $region17
  $region16: #{model_forward.1} parent=0 // pred_region
    _
  $region17: #{model_forward.1} parent=0 // pred_fallthru
    _
  // Predicated region
  $region18: #{model_forward.1} parent=0 // pred_check
    _
  $region19: #{model_forward.1} parent=0 // pred_check_branch
    %90 = sbr.rel (0) target = $region21
  $region20: #{model_forward.1} parent=0 // pred_region
    _
  $region21: #{model_forward.1} parent=0 // pred_fallthru
    _

</llo_original>
